<compile_context>
chip_gen: v5e
topology: v5e:2x2
jax: 0.10.0
libtpu: 0.0.40
codegen_flags: <defaults>
</compile_context>

<pallas_src>
import jax
import jax.numpy as jnp
from jax.experimental import pallas as pl
from jax.experimental.pallas import tpu as pltpu

DROP_P = 0.25
_KEEP_THRESH = int(DROP_P * (1 << 32))     # bits >= thresh  =>  keep (P = 1 - p)
_PAD = 32                                  # padded feature width for every layer
DIMS = (30, 16, 18, 20, 24, 2)
N_LAYERS = 5


def _mlp_kernel(x_ref, bits_ref, w_ref, b_ref, o_ref):
    """One batch tile of the CardMLP forward pass.

    x_ref   : (TILE_N, 32) f32   input, zero-padded 30 -> 32
    bits_ref: (TILE_N, 32) u32   random bits for dropout after fc2
    w_ref   : (5, 32, 32)  f32   zero-padded weights, layer l stored (in, out)
    b_ref   : (8, 32)      f32   zero-padded biases (rows 0..4 used)
    o_ref   : (TILE_N, 2)  f32   logits
    """
    h = x_ref[...]

    # fc1 + relu
    h = jnp.maximum(
        jnp.dot(h, w_ref[0], preferred_element_type=jnp.float32) + b_ref[0:1, :], 0.0)
    # fc2 + relu
    h = jnp.maximum(
        jnp.dot(h, w_ref[1], preferred_element_type=jnp.float32) + b_ref[1:2, :], 0.0)

    # inverted dropout p=0.25 (F.dropout defaults to training=True -> always applied)
    keep = bits_ref[...] >= jnp.uint32(_KEEP_THRESH)          # one u32 compare / elem
    h = jnp.where(keep, h * jnp.float32(1.0 / (1.0 - DROP_P)), 0.0)

    # fc3 + relu
    h = jnp.maximum(
        jnp.dot(h, w_ref[2], preferred_element_type=jnp.float32) + b_ref[2:3, :], 0.0)
    # fc4 + relu
    h = jnp.maximum(
        jnp.dot(h, w_ref[3], preferred_element_type=jnp.float32) + b_ref[3:4, :], 0.0)

    # fc5 (no activation); only the first 2 of the 32 padded output cols are real
    out = jnp.dot(h, w_ref[4], preferred_element_type=jnp.float32) + b_ref[4:5, :]
    o_ref[...] = out[:, :2].astype(o_ref.dtype)


def pack_params(params):
    """Pack per-layer (in,out) weights / (1,out) biases into zero-padded slabs."""
    w_slab = jnp.zeros((N_LAYERS, _PAD, _PAD), jnp.float32)
    b_slab = jnp.zeros((8, _PAD), jnp.float32)
    for i in range(N_LAYERS):
        w = params[f"w{i + 1}"]                 # (in, out)
        b = params[f"b{i + 1}"].reshape(-1)     # (out,)
        w_slab = w_slab.at[i, : w.shape[0], : w.shape[1]].set(w)
        b_slab = b_slab.at[i, : b.shape[0]].set(b)
    return w_slab, b_slab


def card_mlp_forward(x, params, key, *, tile_n=1024):
    """x: (N, 30) f32. key: jax PRNG key for the dropout mask (vary per step!)."""
    n, f = x.shape
    assert f == DIMS[0], f
    w_slab, b_slab = pack_params(params)

    # Batch tile: sublane-aligned, capped so tiny batches don't over-pad.
    tile_n = max(8, min(int(tile_n), pl.next_power_of_2(max(n, 1))))
    tile_n = ((tile_n + 7) // 8) * 8
    n_pad = pl.cdiv(n, tile_n) * tile_n

    x_pad = jnp.zeros((n_pad, _PAD), jnp.float32).at[:n, :f].set(x.astype(jnp.float32))
    # Dropout randomness generated with jax.random (portable; per-tile masks are
    # automatically independent because the bits array is tiled along the batch).
    bits = jax.random.bits(key, (n_pad, _PAD), dtype=jnp.uint32)

    out = pl.pallas_call(
        _mlp_kernel,
        out_shape=jax.ShapeDtypeStruct((n_pad, 2), jnp.float32),
        grid=(n_pad // tile_n,),
        in_specs=[
            pl.BlockSpec((tile_n, _PAD), lambda i: (i, 0)),              # x tile
            pl.BlockSpec((tile_n, _PAD), lambda i: (i, 0)),              # dropout bits
            pl.BlockSpec((N_LAYERS, _PAD, _PAD), lambda i: (0, 0, 0)),   # weights (resident)
            pl.BlockSpec((8, _PAD), lambda i: (0, 0)),                   # biases (resident)
        ],
        out_specs=pl.BlockSpec((tile_n, 2), lambda i: (i, 0)),
        compiler_params=pltpu.CompilerParams(
            dimension_semantics=("parallel",)),                          # megacore on v7x
    )(x_pad, bits, w_slab, b_slab)
    return out[:n]


def init_params(key):
    """Deterministic init mimicking nn.Linear: U(-1/sqrt(fan_in), 1/sqrt(fan_in))."""
    params = {}
    for i in range(N_LAYERS):
        fan_in, fan_out = DIMS[i], DIMS[i + 1]
        key, kw, kb = jax.random.split(key, 3)
        bound = 1.0 / (fan_in ** 0.5)
        # stored (in, out) so the kernel computes x @ W
        params[f"w{i + 1}"] = jax.random.uniform(
            kw, (fan_in, fan_out), jnp.float32, minval=-bound, maxval=bound)
        params[f"b{i + 1}"] = jax.random.uniform(
            kb, (1, fan_out), jnp.float32, minval=-bound, maxval=bound)
    return params


if __name__ == "__main__":
    key = jax.random.PRNGKey(0)
    key_x, key_p, key_drop = jax.random.split(key, 3)

    batch = 8
    x = jax.random.normal(key_x, (batch, DIMS[0]), dtype=jnp.float32)
    params = init_params(key_p)

    out = card_mlp_forward(x, params, key_drop)
    out = jax.block_until_ready(out)

    assert out.shape == (batch, 2), out.shape
    assert out.dtype == jnp.float32, out.dtype
    assert bool(jnp.all(jnp.isfinite(out)))
    print("KERNEL_OK")
</pallas_src>

<mosaic_0001>
module attributes {stable_mosaic.version = 11 : i64} {
  func.func @_mlp_kernel(%arg0: i32, %arg1: memref<8x32xf32, #tpu.memory_space<vmem>>, %arg2: memref<8x32xi32, #tpu.memory_space<vmem>>, %arg3: memref<5x32x32xf32, #tpu.memory_space<vmem>>, %arg4: memref<8x32xf32, #tpu.memory_space<vmem>>, %arg5: memref<8x2xf32, #tpu.memory_space<vmem>>) attributes {dimension_semantics = [#tpu.dimension_semantics<parallel>], iteration_bounds = array<i64: 1>, scalar_prefetch = 0 : i64, scratch_operands = 0 : i64, tpu.core_type = #tpu.core_type<tc>, window_params = [{transform_indices = @transform_0, window_bounds = array<i64: 8, 32>}, {transform_indices = @transform_1, window_bounds = array<i64: 8, 32>}, {pipeline_mode = #tpu.pipeline_mode<synchronous>, transform_indices = @transform_2, window_bounds = array<i64: 5, 32, 32>}, {pipeline_mode = #tpu.pipeline_mode<synchronous>, transform_indices = @transform_3, window_bounds = array<i64: 8, 32>}, {transform_indices = @transform_4, window_bounds = array<i64: 8, 2>}]} {
    %c0 = arith.constant 0 : index
    %c0_0 = arith.constant 0 : index
    %0 = vector.load %arg1[%c0, %c0_0] : memref<8x32xf32, #tpu.memory_space<vmem>>, vector<8x32xf32>
    %c0_1 = arith.constant 0 : index
    %c0_2 = arith.constant 0 : index
    %c0_3 = arith.constant 0 : index
    %1 = vector.load %arg3[%c0_1, %c0_2, %c0_3] : memref<5x32x32xf32, #tpu.memory_space<vmem>>, vector<1x32x32xf32>
    %2 = vector.shape_cast %1 : vector<1x32x32xf32> to vector<32x32xf32>
    %cst = arith.constant dense<0.000000e+00> : vector<8x32xf32>
    %3 = tpu.matmul %0, %2, %cst {dimension_numbers = #tpu.dot_dimension_numbers<[1], [0], [0], [1], [0, 0, 1, 1], [], []>} : vector<8x32xf32>, vector<32x32xf32>, vector<8x32xf32> -> vector<8x32xf32>
    %c0_4 = arith.constant 0 : index
    %c0_5 = arith.constant 0 : index
    %4 = vector.load %arg4[%c0_4, %c0_5] : memref<8x32xf32, #tpu.memory_space<vmem>>, vector<1x32xf32>
    %5 = vector.broadcast %4 : vector<1x32xf32> to vector<8x32xf32>
    %6 = arith.addf %3, %5 : vector<8x32xf32>
    %cst_6 = arith.constant 0.000000e+00 : f32
    %7 = vector.broadcast %cst_6 : f32 to vector<8x32xf32>
    %8 = arith.maximumf %6, %7 : vector<8x32xf32>
    %c1 = arith.constant 1 : index
    %c0_7 = arith.constant 0 : index
    %c0_8 = arith.constant 0 : index
    %9 = vector.load %arg3[%c1, %c0_7, %c0_8] : memref<5x32x32xf32, #tpu.memory_space<vmem>>, vector<1x32x32xf32>
    %10 = vector.shape_cast %9 : vector<1x32x32xf32> to vector<32x32xf32>
    %cst_9 = arith.constant dense<0.000000e+00> : vector<8x32xf32>
    %11 = tpu.matmul %8, %10, %cst_9 {dimension_numbers = #tpu.dot_dimension_numbers<[1], [0], [0], [1], [0, 0, 1, 1], [], []>} : vector<8x32xf32>, vector<32x32xf32>, vector<8x32xf32> -> vector<8x32xf32>
    %c1_10 = arith.constant 1 : index
    %c0_11 = arith.constant 0 : index
    %12 = vector.load %arg4[%c1_10, %c0_11] : memref<8x32xf32, #tpu.memory_space<vmem>>, vector<1x32xf32>
    %13 = vector.broadcast %12 : vector<1x32xf32> to vector<8x32xf32>
    %14 = arith.addf %11, %13 : vector<8x32xf32>
    %cst_12 = arith.constant 0.000000e+00 : f32
    %15 = vector.broadcast %cst_12 : f32 to vector<8x32xf32>
    %16 = arith.maximumf %14, %15 : vector<8x32xf32>
    %c0_13 = arith.constant 0 : index
    %c0_14 = arith.constant 0 : index
    %17 = vector.load %arg2[%c0_13, %c0_14] : memref<8x32xi32, #tpu.memory_space<vmem>>, vector<8x32xi32>
    %c1073741824_i32 = arith.constant 1073741824 : i32
    %18 = vector.broadcast %c1073741824_i32 : i32 to vector<8x32xi32>
    %19 = arith.cmpi uge, %17, %18 : vector<8x32xi32>
    %cst_15 = arith.constant 1.33333337 : f32
    %20 = vector.broadcast %cst_15 : f32 to vector<8x32xf32>
    %21 = arith.mulf %16, %20 : vector<8x32xf32>
    %cst_16 = arith.constant 0.000000e+00 : f32
    %22 = vector.broadcast %cst_16 : f32 to vector<8x32xf32>
    %23 = arith.select %19, %21, %22 : vector<8x32xi1>, vector<8x32xf32>
    %c2 = arith.constant 2 : index
    %c0_17 = arith.constant 0 : index
    %c0_18 = arith.constant 0 : index
    %24 = vector.load %arg3[%c2, %c0_17, %c0_18] : memref<5x32x32xf32, #tpu.memory_space<vmem>>, vector<1x32x32xf32>
    %25 = vector.shape_cast %24 : vector<1x32x32xf32> to vector<32x32xf32>
    %cst_19 = arith.constant dense<0.000000e+00> : vector<8x32xf32>
    %26 = tpu.matmul %23, %25, %cst_19 {dimension_numbers = #tpu.dot_dimension_numbers<[1], [0], [0], [1], [0, 0, 1, 1], [], []>} : vector<8x32xf32>, vector<32x32xf32>, vector<8x32xf32> -> vector<8x32xf32>
    %c2_20 = arith.constant 2 : index
    %c0_21 = arith.constant 0 : index
    %27 = vector.load %arg4[%c2_20, %c0_21] : memref<8x32xf32, #tpu.memory_space<vmem>>, vector<1x32xf32>
    %28 = vector.broadcast %27 : vector<1x32xf32> to vector<8x32xf32>
    %29 = arith.addf %26, %28 : vector<8x32xf32>
    %cst_22 = arith.constant 0.000000e+00 : f32
    %30 = vector.broadcast %cst_22 : f32 to vector<8x32xf32>
    %31 = arith.maximumf %29, %30 : vector<8x32xf32>
    %c3 = arith.constant 3 : index
    %c0_23 = arith.constant 0 : index
    %c0_24 = arith.constant 0 : index
    %32 = vector.load %arg3[%c3, %c0_23, %c0_24] : memref<5x32x32xf32, #tpu.memory_space<vmem>>, vector<1x32x32xf32>
    %33 = vector.shape_cast %32 : vector<1x32x32xf32> to vector<32x32xf32>
    %cst_25 = arith.constant dense<0.000000e+00> : vector<8x32xf32>
    %34 = tpu.matmul %31, %33, %cst_25 {dimension_numbers = #tpu.dot_dimension_numbers<[1], [0], [0], [1], [0, 0, 1, 1], [], []>} : vector<8x32xf32>, vector<32x32xf32>, vector<8x32xf32> -> vector<8x32xf32>
    %c3_26 = arith.constant 3 : index
    %c0_27 = arith.constant 0 : index
    %35 = vector.load %arg4[%c3_26, %c0_27] : memref<8x32xf32, #tpu.memory_space<vmem>>, vector<1x32xf32>
    %36 = vector.broadcast %35 : vector<1x32xf32> to vector<8x32xf32>
    %37 = arith.addf %34, %36 : vector<8x32xf32>
    %cst_28 = arith.constant 0.000000e+00 : f32
    %38 = vector.broadcast %cst_28 : f32 to vector<8x32xf32>
    %39 = arith.maximumf %37, %38 : vector<8x32xf32>
    %c4 = arith.constant 4 : index
    %c0_29 = arith.constant 0 : index
    %c0_30 = arith.constant 0 : index
    %40 = vector.load %arg3[%c4, %c0_29, %c0_30] : memref<5x32x32xf32, #tpu.memory_space<vmem>>, vector<1x32x32xf32>
    %41 = vector.shape_cast %40 : vector<1x32x32xf32> to vector<32x32xf32>
    %cst_31 = arith.constant dense<0.000000e+00> : vector<8x32xf32>
    %42 = tpu.matmul %39, %41, %cst_31 {dimension_numbers = #tpu.dot_dimension_numbers<[1], [0], [0], [1], [0, 0, 1, 1], [], []>} : vector<8x32xf32>, vector<32x32xf32>, vector<8x32xf32> -> vector<8x32xf32>
    %c4_32 = arith.constant 4 : index
    %c0_33 = arith.constant 0 : index
    %43 = vector.load %arg4[%c4_32, %c0_33] : memref<8x32xf32, #tpu.memory_space<vmem>>, vector<1x32xf32>
    %44 = vector.broadcast %43 : vector<1x32xf32> to vector<8x32xf32>
    %45 = arith.addf %42, %44 : vector<8x32xf32>
    %46 = vector.extract_strided_slice %45 {offsets = [0, 0], sizes = [8, 2], strides = [1, 1]} : vector<8x32xf32> to vector<8x2xf32>
    %c0_34 = arith.constant 0 : index
    %c0_35 = arith.constant 0 : index
    %47 = vector.load %arg5[%c0_34, %c0_35] : memref<8x2xf32, #tpu.memory_space<vmem>>, vector<8x2xf32>
    tpu.vector_store %arg5[%c0_34, %c0_35], %46 {strides = array<i32>} : memref<8x2xf32, #tpu.memory_space<vmem>>, vector<8x2xf32>,
    return
  }
  func.func @transform_0(%arg0: i32) -> (i32, i32) {
    %c0_i32 = arith.constant 0 : i32
    %c0_i32_0 = arith.constant 0 : i32
    return %arg0, %c0_i32 : i32, i32
  }
  func.func @transform_1(%arg0: i32) -> (i32, i32) {
    %c0_i32 = arith.constant 0 : i32
    %c0_i32_0 = arith.constant 0 : i32
    return %arg0, %c0_i32 : i32, i32
  }
  func.func @transform_2(%arg0: i32) -> (i32, i32, i32) {
    %c0_i32 = arith.constant 0 : i32
    %c0_i32_0 = arith.constant 0 : i32
    %c0_i32_1 = arith.constant 0 : i32
    %c0_i32_2 = arith.constant 0 : i32
    return %c0_i32, %c0_i32_0, %c0_i32_1 : i32, i32, i32
  }
  func.func @transform_3(%arg0: i32) -> (i32, i32) {
    %c0_i32 = arith.constant 0 : i32
    %c0_i32_0 = arith.constant 0 : i32
    %c0_i32_1 = arith.constant 0 : i32
    return %c0_i32, %c0_i32_0 : i32, i32
  }
  func.func @transform_4(%arg0: i32) -> (i32, i32) {
    %c0_i32 = arith.constant 0 : i32
    %c0_i32_0 = arith.constant 0 : i32
    return %arg0, %c0_i32 : i32, i32
  }
}

</mosaic_0001>

<llo_original>
// kernel: tpu_custom_call.1
$region0: #{tpu_custom_call.1}
  #allocation0 [shape = 'u32[]', space=smem, size = 0x4, offset = 0x4, fixed_abs, tag = 'smem constant byte address 0x4 - core index']
  #allocation1 [shape = 'u32[72,128]{1,0:T(1,128)}', space=vmem, size = 0x9000, scoped, tag = 'internal scratch']
  %s0 = inlined_call_operand.hbm [shape: f32[8,32], index: 0, kind: input, shape index: {}]
  %s1 = inlined_call_operand.hbm [shape: u32[8,32], index: 1, kind: input, shape index: {}]
  %s2 = inlined_call_operand.hbm [shape: f32[5,32,32], index: 2, kind: input, shape index: {}]
  %s3 = inlined_call_operand.hbm [shape: f32[8,32], index: 3, kind: input, shape index: {}]
  %s4 = inlined_call_operand.vmem [shape: f32[8,2], index: 4, kind: output, shape index: {}]
  %s5 = sld [smem:[#allocation0]]
  $region42: #{tpu_custom_call.1} parent=0
    _
  %s7 = ssub.s32 1, %s5
  %s8 = scalar_select 0, %s7, %s5
  $region1: #{tpu_custom_call.1} parent=0
    #allocation2 [shape = 'u8[4096]{0}', space=vmem, size = 0x1000, scoped, tag = 'input window, operand 0, single buffered']
    #allocation3 [shape = 's32[1]{0}', space=sflag, size = 0x4, scoped, tag = 'scoped memory for tpu_custom_call.1']
    #allocation4 [shape = 'u8[4096]{0}', space=vmem, size = 0x1000, scoped, tag = 'input window, operand 1, single buffered']
    #allocation5 [shape = 's32[1]{0}', space=sflag, size = 0x4, scoped, tag = 'scoped memory for tpu_custom_call.1']
    #allocation6 [shape = 'u8[81920]{0}', space=vmem, size = 0x14000, scoped, tag = 'input window, operand 2, single buffered']
    #allocation7 [shape = 'u8[4096]{0}', space=vmem, size = 0x1000, scoped, tag = 'input window, operand 3, single buffered']
    #allocation8 [shape = 's32[1]{0}', space=sflag, size = 0x4, scoped, tag = 'scoped memory for tpu_custom_call.1']
    %9 = vsyncpa [#allocation3], 0
    %10 = vsyncpa [#allocation5], 0
    %11 = vsyncpa [#allocation8], 0
    // Predicated region
    $region2: #{tpu_custom_call.1} parent=1 // pred_check
      _
    $region3: #{tpu_custom_call.1} parent=1 // pred_check_branch
      %13 = sbr.rel (0) target = $region5
    $region4: #{tpu_custom_call.1} parent=1 // pred_region
      %15 = vsyncadd [#allocation3], 0
      %s17 = sshll.u32 %s0, 4
      %s18 = int_to_ptr.hbm [resolvable:$true] %s17
      %s19 = sshll.u32 [#allocation2], 4
      %s20 = int_to_ptr.vmem [resolvable:$true] %s19
      %22 = dma.hbm_to_vmem [thread:$0]  %s18, 128, %s20, [#allocation3]
    $region5: #{tpu_custom_call.1} parent=1 // pred_fallthru
      _
    // Predicated region
    $region6: #{tpu_custom_call.1} parent=1 // pred_check
      _
    $region7: #{tpu_custom_call.1} parent=1 // pred_check_branch
      %24 = sbr.rel (0) target = $region9
    $region8: #{tpu_custom_call.1} parent=1 // pred_region
      %26 = vsyncadd [#allocation5], 0
      %s28 = sshll.u32 %s1, 4
      %s29 = int_to_ptr.hbm [resolvable:$true] %s28
      %s30 = sshll.u32 [#allocation4], 4
      %s31 = int_to_ptr.vmem [resolvable:$true] %s30
      %33 = dma.hbm_to_vmem [thread:$0]  %s29, 128, %s31, [#allocation5]
    $region9: #{tpu_custom_call.1} parent=1 // pred_fallthru
      _
    // Predicated region
    $region10: #{tpu_custom_call.1} parent=1 // pred_check
      _
    $region11: #{tpu_custom_call.1} parent=1 // pred_check_branch
      %35 = sbr.rel (0) target = $region13
    $region12: #{tpu_custom_call.1} parent=1 // pred_region
      %37 = vsyncadd [#allocation5], 0
      %s38 = sshll.u32 %s2, 4
      %s39 = int_to_ptr.hbm [resolvable:$true] %s38
      %s40 = sshll.u32 [#allocation6], 4
      %s41 = int_to_ptr.vmem [resolvable:$true] %s40
      %46 = dma.hbm_to_vmem [thread:$0]  %s39, 2560, %s41, [#allocation5], 128, 128, 8
    $region13: #{tpu_custom_call.1} parent=1 // pred_fallthru
      _
    // Predicated region
    $region14: #{tpu_custom_call.1} parent=1 // pred_check
      _
    $region15: #{tpu_custom_call.1} parent=1 // pred_check_branch
      %48 = sbr.rel (0) target = $region17
    $region16: #{tpu_custom_call.1} parent=1 // pred_region
      %50 = vsyncadd [#allocation8], 0
      %s52 = sshll.u32 %s3, 4
      %s53 = int_to_ptr.hbm [resolvable:$true] %s52
      %s54 = sshll.u32 [#allocation7], 4
      %s55 = int_to_ptr.vmem [resolvable:$true] %s54
      %57 = dma.hbm_to_vmem [thread:$0]  %s53, 128, %s55, [#allocation8]
    $region17: #{tpu_custom_call.1} parent=1 // pred_fallthru
      _
    // Predicated region
    $region18: #{tpu_custom_call.1} parent=1 // pred_check
      _
    $region19: #{tpu_custom_call.1} parent=1 // pred_check_branch
      %59 = sbr.rel (0) target = $region21
    $region20: #{tpu_custom_call.1} parent=1 // pred_region
      %61 = dma.done [#allocation3], 128
    $region21: #{tpu_custom_call.1} parent=1 // pred_fallthru
      _
    // Predicated region
    $region22: #{tpu_custom_call.1} parent=1 // pred_check
      _
    $region23: #{tpu_custom_call.1} parent=1 // pred_check_branch
      %63 = sbr.rel (0) target = $region25
    $region24: #{tpu_custom_call.1} parent=1 // pred_region
      %65 = dma.done [#allocation5], 128
    $region25: #{tpu_custom_call.1} parent=1 // pred_fallthru
      _
    // Predicated region
    $region26: #{tpu_custom_call.1} parent=1 // pred_check
      _
    $region27: #{tpu_custom_call.1} parent=1 // pred_check_branch
      %67 = sbr.rel (0) target = $region29
    $region28: #{tpu_custom_call.1} parent=1 // pred_region
      %69 = dma.done [#allocation5], 2560
    $region29: #{tpu_custom_call.1} parent=1 // pred_fallthru
      _
    // Predicated region
    $region30: #{tpu_custom_call.1} parent=1 // pred_check
      _
    $region31: #{tpu_custom_call.1} parent=1 // pred_check_branch
      %71 = sbr.rel (0) target = $region33
    $region32: #{tpu_custom_call.1} parent=1 // pred_region
      %73 = dma.done [#allocation8], 128
    $region33: #{tpu_custom_call.1} parent=1 // pred_fallthru
      _
    %v74 = vld [vmem:[#allocation2] sm:$0xff]
    %v75 = vld [vmem:[#allocation6] sm:$0xff]
    %v76 = vld [vmem:[#allocation6 + $0x8] sm:$0xff]
    %v77 = vld [vmem:[#allocation6 + $0x10] sm:$0xff]
    %v78 = vld [vmem:[#allocation6 + $0x18] sm:$0xff]
    %v79 = vld [vmem:[#allocation7] sm:$0x1]
    %v80 = vperm.slane %v79, 0
    %vm81 = vcmask 261120
    %v83 = vsel %vm81, %v74, 0
    %85 = vmatpush.msra.mxu0 0.0
    %86 = vmatpush.msra.mxu0 0.0
    %87 = vmatpush.msra.mxu0 0.0
    %88 = vmatpush.msra.mxu0 0.0
    %89 = vmatpush.msra.mxu0 0.0
    %90 = vmatpush.msra.mxu0 0.0
    %91 = vmatpush.msra.mxu0 0.0
    %92 = vmatpush.msra.mxu0 0.0
    %93 = vmatpush.msra.mxu0 0.0
    %94 = vmatpush.msra.mxu0 0.0
    %95 = vmatpush.msra.mxu0 0.0
    %96 = vmatpush.msra.mxu0 0.0
    %97 = vmatpush.msra.mxu0 %v78
    %98 = vmatpush.msra.mxu0 %v77
    %99 = vmatpush.msra.mxu0 %v76
    %100 = vmatpush.msra.mxu0 %v75
    %101 = vmatmul.f32.gmra.mxu0 %v83
    %v102 = vpop.f32.mrf.mxu0
    %v103 = vadd.f32 %v80, %v102
    %104 = vdwg.mxu0
    %v105 = vmax.f32 %v103, 0.0
    %s106 = scalar_lea.vmem [#allocation6], 32
    %v107 = vld [vmem:[%s106] sm:$0xff]
    %v108 = vld [vmem:[%s106 + $0x8] sm:$0xff]
    %v109 = vld [vmem:[%s106 + $0x10] sm:$0xff]
    %v110 = vld [vmem:[%s106 + $0x18] sm:$0xff]
    %v111 = vld [vmem:[#allocation7 + $0x1] sm:$0x1]
    %v112 = vperm.slane %v111, 0
    %v114 = vsel %vm81, %v105, 0
    %116 = vmatpush.msra.mxu0 0.0
    %117 = vmatpush.msra.mxu0 0.0
    %118 = vmatpush.msra.mxu0 0.0
    %119 = vmatpush.msra.mxu0 0.0
    %120 = vmatpush.msra.mxu0 0.0
    %121 = vmatpush.msra.mxu0 0.0
    %122 = vmatpush.msra.mxu0 0.0
    %123 = vmatpush.msra.mxu0 0.0
    %124 = vmatpush.msra.mxu0 0.0
    %125 = vmatpush.msra.mxu0 0.0
    %126 = vmatpush.msra.mxu0 0.0
    %127 = vmatpush.msra.mxu0 0.0
    %128 = vmatpush.msra.mxu0 %v110
    %129 = vmatpush.msra.mxu0 %v109
    %130 = vmatpush.msra.mxu0 %v108
    %131 = vmatpush.msra.mxu0 %v107
    %132 = vmatmul.f32.gmra.mxu0 %v114
    %v133 = vpop.f32.mrf.mxu0
    %v134 = vadd.f32 %v112, %v133
    %135 = vdwg.mxu0
    %v136 = vmax.f32 %v134, 0.0
    %v137 = vld [vmem:[#allocation4] sm:$0xff]
    %v138 = vadd.s32 %v137, 2147483648
    %vm140 = vcmp.ge.s32.totalorder %v138, 3221225472
    %v141 = vmul.f32 %v136, 1.3333334
    %v142 = vsel %vm140, %v141, 0.0
    %s143 = scalar_lea.vmem [#allocation6], 64
    %v144 = vld [vmem:[%s143] sm:$0xff]
    %v145 = vld [vmem:[%s143 + $0x8] sm:$0xff]
    %v146 = vld [vmem:[%s143 + $0x10] sm:$0xff]
    %v147 = vld [vmem:[%s143 + $0x18] sm:$0xff]
    %v148 = vld [vmem:[#allocation7 + $0x2] sm:$0x1]
    %v149 = vperm.slane %v148, 0
    %v151 = vsel %vm81, %v142, 0
    %153 = vmatpush.msra.mxu0 0.0
    %154 = vmatpush.msra.mxu0 0.0
    %155 = vmatpush.msra.mxu0 0.0
    %156 = vmatpush.msra.mxu0 0.0
    %157 = vmatpush.msra.mxu0 0.0
    %158 = vmatpush.msra.mxu0 0.0
    %159 = vmatpush.msra.mxu0 0.0
    %160 = vmatpush.msra.mxu0 0.0
    %161 = vmatpush.msra.mxu0 0.0
    %162 = vmatpush.msra.mxu0 0.0
    %163 = vmatpush.msra.mxu0 0.0
    %164 = vmatpush.msra.mxu0 0.0
    %165 = vmatpush.msra.mxu0 %v147
    %166 = vmatpush.msra.mxu0 %v146
    %167 = vmatpush.msra.mxu0 %v145
    %168 = vmatpush.msra.mxu0 %v144
    %169 = vmatmul.f32.gmra.mxu0 %v151
    %v170 = vpop.f32.mrf.mxu0
    %v171 = vadd.f32 %v149, %v170
    %172 = vdwg.mxu0
    %v173 = vmax.f32 %v171, 0.0
    %s174 = scalar_lea.vmem [#allocation6], 96
    %v175 = vld [vmem:[%s174] sm:$0xff]
    %v176 = vld [vmem:[%s174 + $0x8] sm:$0xff]
    %v177 = vld [vmem:[%s174 + $0x10] sm:$0xff]
    %v178 = vld [vmem:[%s174 + $0x18] sm:$0xff]
    %v179 = vld [vmem:[#allocation7 + $0x3] sm:$0x1]
    %v180 = vperm.slane %v179, 0
    %v182 = vsel %vm81, %v173, 0
    %184 = vmatpush.msra.mxu0 0.0
    %185 = vmatpush.msra.mxu0 0.0
    %186 = vmatpush.msra.mxu0 0.0
    %187 = vmatpush.msra.mxu0 0.0
    %188 = vmatpush.msra.mxu0 0.0
    %189 = vmatpush.msra.mxu0 0.0
    %190 = vmatpush.msra.mxu0 0.0
    %191 = vmatpush.msra.mxu0 0.0
    %192 = vmatpush.msra.mxu0 0.0
    %193 = vmatpush.msra.mxu0 0.0
    %194 = vmatpush.msra.mxu0 0.0
    %195 = vmatpush.msra.mxu0 0.0
    %196 = vmatpush.msra.mxu0 %v178
    %197 = vmatpush.msra.mxu0 %v177
    %198 = vmatpush.msra.mxu0 %v176
    %199 = vmatpush.msra.mxu0 %v175
    %200 = vmatmul.f32.gmra.mxu0 %v182
    %v201 = vpop.f32.mrf.mxu0
    %v202 = vadd.f32 %v180, %v201
    %203 = vdwg.mxu0
    %v204 = vmax.f32 %v202, 0.0
    %s205 = scalar_lea.vmem [#allocation6], 128
    %v206 = vld [vmem:[%s205] sm:$0xff]
    %v207 = vld [vmem:[%s205 + $0x8] sm:$0xff]
    %v208 = vld [vmem:[%s205 + $0x10] sm:$0xff]
    %v209 = vld [vmem:[%s205 + $0x18] sm:$0xff]
    %v210 = vld [vmem:[#allocation7 + $0x4] sm:$0x1]
    %v211 = vperm.slane %v210, 0
    %v213 = vsel %vm81, %v204, 0
    %215 = vmatpush.msra.mxu0 0.0
    %216 = vmatpush.msra.mxu0 0.0
    %217 = vmatpush.msra.mxu0 0.0
    %218 = vmatpush.msra.mxu0 0.0
    %219 = vmatpush.msra.mxu0 0.0
    %220 = vmatpush.msra.mxu0 0.0
    %221 = vmatpush.msra.mxu0 0.0
    %222 = vmatpush.msra.mxu0 0.0
    %223 = vmatpush.msra.mxu0 0.0
    %224 = vmatpush.msra.mxu0 0.0
    %225 = vmatpush.msra.mxu0 0.0
    %226 = vmatpush.msra.mxu0 0.0
    %227 = vmatpush.msra.mxu0 %v209
    %228 = vmatpush.msra.mxu0 %v208
    %229 = vmatpush.msra.mxu0 %v207
    %230 = vmatpush.msra.mxu0 %v206
    %231 = vmatmul.f32.gmra.mxu0 %v213
    %v232 = vpop.f32.mrf.mxu0
    %v233 = vadd.f32 %v211, %v232
    %234 = vdwg.mxu0
    %vm235 = vcmask 15360
    %236 = vst.msk [vmem:[%s4] sm:$0xff] %vm235, %v233
    // Predicated region
    $region34: #{tpu_custom_call.1} parent=1 // pred_check
      _
    $region35: #{tpu_custom_call.1} parent=1 // pred_check_branch
      %238 = sbr.rel (0) target = $region37
    $region36: #{tpu_custom_call.1} parent=1 // pred_region
      _
    $region37: #{tpu_custom_call.1} parent=1 // pred_fallthru
      _
    // Predicated region
    $region38: #{tpu_custom_call.1} parent=1 // pred_check
      _
    $region39: #{tpu_custom_call.1} parent=1 // pred_check_branch
      %240 = sbr.rel (0) target = $region41
    $region40: #{tpu_custom_call.1} parent=1 // pred_region
      _
    $region41: #{tpu_custom_call.1} parent=1 // pred_fallthru
      _
    %241 = vsyncpa [#allocation3], 1
    %242 = vsyncpa [#allocation5], 1
    %243 = vsyncpa [#allocation8], 1

</llo_original>
